<compile_context>
chip_gen: v6e
topology: v6e:2x2x1
jax: 0.10.0
libtpu: 0.0.40
codegen_flags: <defaults>
</compile_context>

<pallas_src>
import functools

import jax
import jax.numpy as jnp
from jax import lax
from jax.experimental import pallas as pl
from jax.experimental.pallas import tpu as pltpu


def _leaky(x, slope=0.2):
    return jnp.where(x >= 0, x, slope * x)


def _shift_up(x, off, lw):
    """result[:, j] = x[:, (j + off) % lw]   (off >= 0, lane axis last)."""
    if off == 0:
        return x
    return pltpu.roll(x, shift=lw - off, axis=1)


def _shift_down(x, off, lw):
    """result[:, j] = x[:, (j - off) % lw]   (off >= 0)."""
    if off == 0:
        return x
    return pltpu.roll(x, shift=off, axis=1)


# ---------------- fused Pallas kernel ----------------

def _fused_kernel(x_ref, w1_ref, w2_ref, out_ref, *, H, W, Cin, Cout, Lp, LW):
    # "Wide" layout: within each Lp-lane image chunk, column j = y*Wp + x with
    # x in [0, Wp).  Columns with x >= W and columns >= H*Wp are garbage that
    # the wrapper slices away (they always stay finite).
    Wp = W + 2
    HWp = H * Wp

    xp = x_ref[0]                                   # (Cin, LW) padded, flat, zero tail
    a1 = _leaky(xp)                                 # activation1 (commutes with pad)
    ones = jnp.ones((1, LW), jnp.float32)

    # per-chunk column index (each Lp-lane chunk holds one image)
    col = lax.broadcasted_iota(jnp.int32, (1, LW), 1) % Lp
    x_mod = col % Wp

    # ---- conv1 (+ bias): stack the 9 shifted taps -> one MXU dot ----
    taps1 = [_shift_up(a1, dy * Wp + dx, LW) for dy in range(3) for dx in range(3)]
    A1 = jnp.concatenate(taps1 + [ones], axis=0)    # (9*Cin+1, LW)
    a2 = _leaky(jnp.dot(w1_ref[...], A1, preferred_element_type=jnp.float32))

    # ---- on-chip reflect pad of the intermediate activation ----
    # width: padded_row = [row[1], row[0:W], row[W-2]] via rolls + iota select
    r1 = _shift_down(a2, 1, LW)                     # a2[j-1]
    r3 = _shift_down(a2, 3, LW)                     # a2[j-3]
    lf = _shift_up(a2, 1, LW)                       # a2[j+1]
    a2w = jnp.where(x_mod == 0, lf, jnp.where(x_mod == Wp - 1, r3, r1))
    # height: row -1 <- row 1, rows 0..H-1, row H <- row H-2
    s_top = _shift_up(a2w, Wp, LW)                  # a2w[j+Wp]
    s_mid = _shift_down(a2w, Wp, LW)                # a2w[j-Wp]
    s_bot = _shift_down(a2w, 3 * Wp, LW)            # a2w[j-3*Wp]
    a2p = jnp.where(col < Wp, s_top, jnp.where(col < Wp + HWp, s_mid, s_bot))

    # ---- conv2 + 1x1 skip + biases: one MXU dot ----
    x_in = _shift_up(xp, Wp + 1, LW)                # pre-activation x, output layout
    taps2 = [_shift_up(a2p, dy * Wp + dx, LW) for dy in range(3) for dx in range(3)]
    A2 = jnp.concatenate(taps2 + [x_in, ones], axis=0)   # (9*Cout+Cin+1, LW)
    out_ref[0] = jnp.dot(w2_ref[...], A2, preferred_element_type=jnp.float32)


# ---------------- JAX glue ----------------

def residual_block_forward(x_nchw, params, *, fold_batch=False):
    w1, b1, w2, b2, ws, bs = params                 # w1/w2 HWIO, ws (Cin, Cout)
    x = x_nchw.astype(jnp.float32)                  # (N, Cin, H, W) NCHW
    N, Cin, H, W = x.shape
    Cout = w1.shape[-1]
    Hp, Wp = H + 2, W + 2
    HWp = H * Wp
    Lp = pl.cdiv(Hp * Wp + 2, 128) * 128            # per-image lane chunk, mult of 128

    # reflect-pad H,W (cheap XLA index shuffle), flatten, zero-pad to Lp lanes.
    # TODO(synk): the input reflect-pad could also move on-chip, but it needs
    # per-row stride-changing shifts; kept in the wrapper.
    xp = jnp.pad(x, ((0, 0), (0, 0), (1, 1), (1, 1)), mode="reflect")
    xp_flat = jnp.pad(xp.reshape(N, Cin, Hp * Wp),
                      ((0, 0), (0, 0), (0, Lp - Hp * Wp)))

    # fused, lane-transposed weights (outputs land lane-dense / already NCHW)
    w1t = w1.reshape(9 * Cin, Cout).T                                   # (Cout, 9*Cin)
    W1 = jnp.concatenate([w1t, b1.reshape(Cout, 1)], axis=1)            # (Cout, 9*Cin+1)
    w2t = w2.reshape(9 * Cout, Cout).T                                  # (Cout, 9*Cout)
    W2 = jnp.concatenate([w2t, ws.T, (b2 + bs).reshape(Cout, 1)],
                         axis=1)                                        # (Cout, 9*Cout+Cin+1)

    if fold_batch:
        # one grid step, batch folded into lanes (best on single-TC v5e/v6e)
        xin = xp_flat.transpose(1, 0, 2).reshape(1, Cin, N * Lp)
        nb, LW = 1, N * Lp
    else:
        # one image per grid step; "parallel" lets v7x's 2 TensorCores split it
        xin = xp_flat
        nb, LW = N, Lp

    kernel = functools.partial(_fused_kernel, H=H, W=W, Cin=Cin, Cout=Cout,
                               Lp=Lp, LW=LW)

    out_flat = pl.pallas_call(
        kernel,
        out_shape=jax.ShapeDtypeStruct((nb, Cout, LW), jnp.float32),
        grid=(nb,),
        in_specs=[
            pl.BlockSpec((1, Cin, LW), lambda n: (n, 0, 0)),
            pl.BlockSpec(W1.shape, lambda n: (0, 0)),
            pl.BlockSpec(W2.shape, lambda n: (0, 0)),
        ],
        out_specs=pl.BlockSpec((1, Cout, LW), lambda n: (n, 0, 0)),
        compiler_params=pltpu.CompilerParams(dimension_semantics=("parallel",)),
    )(xin, W1, W2)

    if fold_batch:
        out_flat = out_flat.reshape(Cout, N, Lp).transpose(1, 0, 2)
    # drop wide-conv garbage columns / padding tail; result is already NCHW.
    return out_flat[:, :, :HWp].reshape(N, Cout, H, Wp)[:, :, :, :W]


# ---------------- pure-JAX reference ----------------

def _reflect_pad_hw_nhwc(x):  # x: (N, H, W, C)
    return jnp.pad(x, ((0, 0), (1, 1), (1, 1), (0, 0)), mode="reflect")


def residual_block_ref(x_nchw, params):
    w1, b1, w2, b2, ws, bs = params
    x = jnp.transpose(x_nchw, (0, 2, 3, 1)).astype(jnp.float32)   # NHWC
    dn = ("NHWC", "HWIO", "NHWC")

    a1 = _leaky(x)
    h1 = lax.conv_general_dilated(_reflect_pad_hw_nhwc(a1), w1, (1, 1), "VALID",
                                  dimension_numbers=dn) + b1
    a2 = _leaky(h1)
    h2 = lax.conv_general_dilated(_reflect_pad_hw_nhwc(a2), w2, (1, 1), "VALID",
                                  dimension_numbers=dn) + b2
    skip = lax.conv_general_dilated(x, ws.reshape(1, 1, *ws.shape), (1, 1), "VALID",
                                    dimension_numbers=dn) + bs
    out = h2 + skip
    return jnp.transpose(out, (0, 3, 1, 2))


# ---------------- parameter init (deterministic, PyTorch-like uniform) ----------------

def init_params(key, nf_in, nf_out):
    ks = jax.random.split(key, 6)

    def u(k, shape, fan_in):
        bound = 1.0 / jnp.sqrt(fan_in)
        return jax.random.uniform(k, shape, jnp.float32, -bound, bound)

    w1 = u(ks[0], (3, 3, nf_in, nf_out), 9 * nf_in)     # HWIO
    b1 = u(ks[1], (nf_out,), 9 * nf_in)
    w2 = u(ks[2], (3, 3, nf_out, nf_out), 9 * nf_out)
    b2 = u(ks[3], (nf_out,), 9 * nf_out)
    ws = u(ks[4], (nf_in, nf_out), nf_in)               # 1x1 skip conv (IO)
    bs = u(ks[5], (nf_out,), nf_in)
    return (w1, b1, w2, b2, ws, bs)


if __name__ == "__main__":
    key = jax.random.PRNGKey(0)
    kx, kp = jax.random.split(key)

    N, Cin, Cout, H, W = 2, 4, 8, 16, 16
    x = jax.random.normal(kx, (N, Cin, H, W), jnp.float32)        # NCHW like PyTorch
    params = init_params(kp, Cin, Cout)

    ref = jax.block_until_ready(residual_block_ref(x, params))

    # default path: grid=(N,) "parallel" (keeps the v7x 2-TensorCore split)
    out = jax.block_until_ready(jax.jit(residual_block_forward)(x, params))
    assert out.shape == (N, Cout, H, W), out.shape
    assert jnp.allclose(out, ref, atol=1e-4, rtol=1e-4), float(jnp.abs(out - ref).max())

    # folded path: whole batch in one grid step (single-TC chips: v5e / v6e)
    out_folded = jax.block_until_ready(
        jax.jit(functools.partial(residual_block_forward, fold_batch=True))(x, params))
    assert jnp.allclose(out_folded, ref, atol=1e-4, rtol=1e-4), \
        float(jnp.abs(out_folded - ref).max())

    print("KERNEL_OK")
</pallas_src>

<mosaic_0001>
module attributes {stable_mosaic.version = 11 : i64} {
  func.func @_fused_kernel(%arg0: i32, %arg1: memref<1x4x384xf32, #tpu.memory_space<vmem>>, %arg2: memref<8x37xf32, #tpu.memory_space<vmem>>, %arg3: memref<8x77xf32, #tpu.memory_space<vmem>>, %arg4: memref<1x8x384xf32, #tpu.memory_space<vmem>>) attributes {dimension_semantics = [#tpu.dimension_semantics<parallel>], iteration_bounds = array<i64: 2>, scalar_prefetch = 0 : i64, scratch_operands = 0 : i64, tpu.core_type = #tpu.core_type<tc>, window_params = [{transform_indices = @transform_0, window_bounds = array<i64: 1, 4, 384>}, {pipeline_mode = #tpu.pipeline_mode<synchronous>, transform_indices = @transform_1, window_bounds = array<i64: 8, 37>}, {pipeline_mode = #tpu.pipeline_mode<synchronous>, transform_indices = @transform_2, window_bounds = array<i64: 8, 77>}, {transform_indices = @transform_3, window_bounds = array<i64: 1, 8, 384>}]} {
    %c0 = arith.constant 0 : index
    %c0_0 = arith.constant 0 : index
    %c0_1 = arith.constant 0 : index
    %0 = vector.load %arg1[%c0, %c0_0, %c0_1] : memref<1x4x384xf32, #tpu.memory_space<vmem>>, vector<1x4x384xf32>
    %1 = vector.shape_cast %0 : vector<1x4x384xf32> to vector<4x384xf32>
    %cst = arith.constant 0.000000e+00 : f32
    %2 = vector.broadcast %cst : f32 to vector<4x384xf32>
    %3 = arith.cmpf oge, %1, %2 : vector<4x384xf32>
    %cst_2 = arith.constant 2.000000e-01 : f32
    %4 = vector.broadcast %cst_2 : f32 to vector<4x384xf32>
    %5 = arith.mulf %4, %1 : vector<4x384xf32>
    %6 = arith.select %3, %1, %5 : vector<4x384xi1>, vector<4x384xf32>
    %cst_3 = arith.constant 1.000000e+00 : f32
    %7 = vector.broadcast %cst_3 : f32 to vector<1x384xf32>
    %8 = tpu.iota {dimensions = array<i32: 1>} : vector<1x384xi32>
    %c384_i32 = arith.constant 384 : i32
    %c0_i32 = arith.constant 0 : i32
    %9 = arith.cmpi eq, %c384_i32, %c0_i32 : i32
    %c1_i32 = arith.constant 1 : i32
    %10 = arith.select %9, %c1_i32, %c384_i32 : i32
    %11 = vector.broadcast %10 : i32 to vector<1x384xi32>
    %12 = arith.remsi %8, %11 : vector<1x384xi32>
    %c0_i32_4 = arith.constant 0 : i32
    %13 = vector.broadcast %c0_i32_4 : i32 to vector<1x384xi32>
    %14 = arith.cmpi ne, %12, %13 : vector<1x384xi32>
    %c0_i32_5 = arith.constant 0 : i32
    %15 = vector.broadcast %c0_i32_5 : i32 to vector<1x384xi32>
    %16 = arith.cmpi slt, %12, %15 : vector<1x384xi32>
    %c0_i32_6 = arith.constant 0 : i32
    %17 = arith.cmpi slt, %10, %c0_i32_6 : i32
    %18 = vector.broadcast %17 : i1 to vector<1x384xi1>
    %19 = vector.broadcast %18 : vector<1x384xi1> to vector<1x384xi1>
    %20 = arith.xori %16, %19 : vector<1x384xi1>
    %21 = arith.andi %20, %14 : vector<1x384xi1>
    %22 = vector.broadcast %10 : i32 to vector<1x384xi32>
    %23 = arith.addi %12, %22 : vector<1x384xi32>
    %24 = arith.select %21, %23, %12 : vector<1x384xi1>, vector<1x384xi32>
    %c18_i32 = arith.constant 18 : i32
    %c0_i32_7 = arith.constant 0 : i32
    %25 = arith.cmpi eq, %c18_i32, %c0_i32_7 : i32
    %c1_i32_8 = arith.constant 1 : i32
    %26 = arith.select %25, %c1_i32_8, %c18_i32 : i32
    %27 = vector.broadcast %26 : i32 to vector<1x384xi32>
    %28 = arith.remsi %24, %27 : vector<1x384xi32>
    %c0_i32_9 = arith.constant 0 : i32
    %29 = vector.broadcast %c0_i32_9 : i32 to vector<1x384xi32>
    %30 = arith.cmpi ne, %28, %29 : vector<1x384xi32>
    %c0_i32_10 = arith.constant 0 : i32
    %31 = vector.broadcast %c0_i32_10 : i32 to vector<1x384xi32>
    %32 = arith.cmpi slt, %28, %31 : vector<1x384xi32>
    %c0_i32_11 = arith.constant 0 : i32
    %33 = arith.cmpi slt, %26, %c0_i32_11 : i32
    %34 = vector.broadcast %33 : i1 to vector<1x384xi1>
    %35 = vector.broadcast %34 : vector<1x384xi1> to vector<1x384xi1>
    %36 = arith.xori %32, %35 : vector<1x384xi1>
    %37 = arith.andi %36, %30 : vector<1x384xi1>
    %38 = vector.broadcast %26 : i32 to vector<1x384xi32>
    %39 = arith.addi %28, %38 : vector<1x384xi32>
    %40 = arith.select %37, %39, %28 : vector<1x384xi1>, vector<1x384xi32>
    %c383_i32 = arith.constant 383 : i32
    %41 = tpu.dynamic_rotate %6 by %c383_i32 dim 1 : vector<4x384xf32>, i32 -> vector<4x384xf32>
    %c382_i32 = arith.constant 382 : i32
    %42 = tpu.dynamic_rotate %6 by %c382_i32 dim 1 : vector<4x384xf32>, i32 -> vector<4x384xf32>
    %c366_i32 = arith.constant 366 : i32
    %43 = tpu.dynamic_rotate %6 by %c366_i32 dim 1 : vector<4x384xf32>, i32 -> vector<4x384xf32>
    %c365_i32 = arith.constant 365 : i32
    %44 = tpu.dynamic_rotate %6 by %c365_i32 dim 1 : vector<4x384xf32>, i32 -> vector<4x384xf32>
    %c364_i32 = arith.constant 364 : i32
    %45 = tpu.dynamic_rotate %6 by %c364_i32 dim 1 : vector<4x384xf32>, i32 -> vector<4x384xf32>
    %c348_i32 = arith.constant 348 : i32
    %46 = tpu.dynamic_rotate %6 by %c348_i32 dim 1 : vector<4x384xf32>, i32 -> vector<4x384xf32>
    %c347_i32 = arith.constant 347 : i32
    %47 = tpu.dynamic_rotate %6 by %c347_i32 dim 1 : vector<4x384xf32>, i32 -> vector<4x384xf32>
    %c346_i32 = arith.constant 346 : i32
    %48 = tpu.dynamic_rotate %6 by %c346_i32 dim 1 : vector<4x384xf32>, i32 -> vector<4x384xf32>
    %49 = tpu.concatenate %6, %41, %42, %43, %44, %45, %46, %47, %48, %7 in 0 : vector<4x384xf32>, vector<4x384xf32>, vector<4x384xf32>, vector<4x384xf32>, vector<4x384xf32>, vector<4x384xf32>, vector<4x384xf32>, vector<4x384xf32>, vector<4x384xf32>, vector<1x384xf32> -> vector<37x384xf32>
    %c0_12 = arith.constant 0 : index
    %c0_13 = arith.constant 0 : index
    %50 = vector.load %arg2[%c0_12, %c0_13] : memref<8x37xf32, #tpu.memory_space<vmem>>, vector<8x37xf32>
    %cst_14 = arith.constant dense<0.000000e+00> : vector<8x384xf32>
    %51 = tpu.matmul %50, %49, %cst_14 {dimension_numbers = #tpu.dot_dimension_numbers<[1], [0], [0], [1], [0, 0, 1, 1], [], []>} : vector<8x37xf32>, vector<37x384xf32>, vector<8x384xf32> -> vector<8x384xf32>
    %cst_15 = arith.constant 0.000000e+00 : f32
    %52 = vector.broadcast %cst_15 : f32 to vector<8x384xf32>
    %53 = arith.cmpf oge, %51, %52 : vector<8x384xf32>
    %cst_16 = arith.constant 2.000000e-01 : f32
    %54 = vector.broadcast %cst_16 : f32 to vector<8x384xf32>
    %55 = arith.mulf %54, %51 : vector<8x384xf32>
    %56 = arith.select %53, %51, %55 : vector<8x384xi1>, vector<8x384xf32>
    %c1_i32_17 = arith.constant 1 : i32
    %57 = tpu.dynamic_rotate %56 by %c1_i32_17 dim 1 : vector<8x384xf32>, i32 -> vector<8x384xf32>
    %c3_i32 = arith.constant 3 : i32
    %58 = tpu.dynamic_rotate %56 by %c3_i32 dim 1 : vector<8x384xf32>, i32 -> vector<8x384xf32>
    %c383_i32_18 = arith.constant 383 : i32
    %59 = tpu.dynamic_rotate %56 by %c383_i32_18 dim 1 : vector<8x384xf32>, i32 -> vector<8x384xf32>
    %c0_i32_19 = arith.constant 0 : i32
    %60 = vector.broadcast %c0_i32_19 : i32 to vector<1x384xi32>
    %61 = arith.cmpi eq, %40, %60 : vector<1x384xi32>
    %c17_i32 = arith.constant 17 : i32
    %62 = vector.broadcast %c17_i32 : i32 to vector<1x384xi32>
    %63 = arith.cmpi eq, %40, %62 : vector<1x384xi32>
    %64 = vector.shape_cast %63 : vector<1x384xi1> to vector<1x384xi1>
    %65 = vector.broadcast %64 : vector<1x384xi1> to vector<8x384xi1>
    %66 = arith.select %65, %58, %57 : vector<8x384xi1>, vector<8x384xf32>
    %67 = vector.shape_cast %61 : vector<1x384xi1> to vector<1x384xi1>
    %68 = vector.broadcast %67 : vector<1x384xi1> to vector<8x384xi1>
    %69 = arith.select %68, %59, %66 : vector<8x384xi1>, vector<8x384xf32>
    %c366_i32_20 = arith.constant 366 : i32
    %70 = tpu.dynamic_rotate %69 by %c366_i32_20 dim 1 : vector<8x384xf32>, i32 -> vector<8x384xf32>
    %c18_i32_21 = arith.constant 18 : i32
    %71 = tpu.dynamic_rotate %69 by %c18_i32_21 dim 1 : vector<8x384xf32>, i32 -> vector<8x384xf32>
    %c54_i32 = arith.constant 54 : i32
    %72 = tpu.dynamic_rotate %69 by %c54_i32 dim 1 : vector<8x384xf32>, i32 -> vector<8x384xf32>
    %c18_i32_22 = arith.constant 18 : i32
    %73 = vector.broadcast %c18_i32_22 : i32 to vector<1x384xi32>
    %74 = arith.cmpi slt, %24, %73 : vector<1x384xi32>
    %c306_i32 = arith.constant 306 : i32
    %75 = vector.broadcast %c306_i32 : i32 to vector<1x384xi32>
    %76 = arith.cmpi slt, %24, %75 : vector<1x384xi32>
    %77 = vector.shape_cast %76 : vector<1x384xi1> to vector<1x384xi1>
    %78 = vector.broadcast %77 : vector<1x384xi1> to vector<8x384xi1>
    %79 = arith.select %78, %71, %72 : vector<8x384xi1>, vector<8x384xf32>
    %80 = vector.shape_cast %74 : vector<1x384xi1> to vector<1x384xi1>
    %81 = vector.broadcast %80 : vector<1x384xi1> to vector<8x384xi1>
    %82 = arith.select %81, %70, %79 : vector<8x384xi1>, vector<8x384xf32>
    %c365_i32_23 = arith.constant 365 : i32
    %83 = tpu.dynamic_rotate %1 by %c365_i32_23 dim 1 : vector<4x384xf32>, i32 -> vector<4x384xf32>
    %c383_i32_24 = arith.constant 383 : i32
    %84 = tpu.dynamic_rotate %82 by %c383_i32_24 dim 1 : vector<8x384xf32>, i32 -> vector<8x384xf32>
    %c382_i32_25 = arith.constant 382 : i32
    %85 = tpu.dynamic_rotate %82 by %c382_i32_25 dim 1 : vector<8x384xf32>, i32 -> vector<8x384xf32>
    %c366_i32_26 = arith.constant 366 : i32
    %86 = tpu.dynamic_rotate %82 by %c366_i32_26 dim 1 : vector<8x384xf32>, i32 -> vector<8x384xf32>
    %c365_i32_27 = arith.constant 365 : i32
    %87 = tpu.dynamic_rotate %82 by %c365_i32_27 dim 1 : vector<8x384xf32>, i32 -> vector<8x384xf32>
    %c364_i32_28 = arith.constant 364 : i32
    %88 = tpu.dynamic_rotate %82 by %c364_i32_28 dim 1 : vector<8x384xf32>, i32 -> vector<8x384xf32>
    %c348_i32_29 = arith.constant 348 : i32
    %89 = tpu.dynamic_rotate %82 by %c348_i32_29 dim 1 : vector<8x384xf32>, i32 -> vector<8x384xf32>
    %c347_i32_30 = arith.constant 347 : i32
    %90 = tpu.dynamic_rotate %82 by %c347_i32_30 dim 1 : vector<8x384xf32>, i32 -> vector<8x384xf32>
    %c346_i32_31 = arith.constant 346 : i32
    %91 = tpu.dynamic_rotate %82 by %c346_i32_31 dim 1 : vector<8x384xf32>, i32 -> vector<8x384xf32>
    %92 = tpu.concatenate %82, %84, %85, %86, %87, %88, %89, %90, %91, %83, %7 in 0 : vector<8x384xf32>, vector<8x384xf32>, vector<8x384xf32>, vector<8x384xf32>, vector<8x384xf32>, vector<8x384xf32>, vector<8x384xf32>, vector<8x384xf32>, vector<8x384xf32>, vector<4x384xf32>, vector<1x384xf32> -> vector<77x384xf32>
    %c0_32 = arith.constant 0 : index
    %c0_33 = arith.constant 0 : index
    %93 = vector.load %arg3[%c0_32, %c0_33] : memref<8x77xf32, #tpu.memory_space<vmem>>, vector<8x77xf32>
    %cst_34 = arith.constant dense<0.000000e+00> : vector<8x384xf32>
    %94 = tpu.matmul %93, %92, %cst_34 {dimension_numbers = #tpu.dot_dimension_numbers<[1], [0], [0], [1], [0, 0, 1, 1], [], []>} : vector<8x77xf32>, vector<77x384xf32>, vector<8x384xf32> -> vector<8x384xf32>
    %c0_35 = arith.constant 0 : index
    %c0_36 = arith.constant 0 : index
    %c0_37 = arith.constant 0 : index
    %95 = vector.load %arg4[%c0_35, %c0_36, %c0_37] : memref<1x8x384xf32, #tpu.memory_space<vmem>>, vector<1x8x384xf32>
    %96 = vector.shape_cast %95 : vector<1x8x384xf32> to vector<8x384xf32>
    %97 = vector.shape_cast %94 : vector<8x384xf32> to vector<1x8x384xf32>
    tpu.vector_store %arg4[%c0_35, %c0_36, %c0_37], %97 {strides = array<i32>} : memref<1x8x384xf32, #tpu.memory_space<vmem>>, vector<1x8x384xf32>,
    return
  }
  func.func @transform_0(%arg0: i32) -> (i32, i32, i32) {
    %c0_i32 = arith.constant 0 : i32
    %c0_i32_0 = arith.constant 0 : i32
    %c0_i32_1 = arith.constant 0 : i32
    return %arg0, %c0_i32, %c0_i32_0 : i32, i32, i32
  }
  func.func @transform_1(%arg0: i32) -> (i32, i32) {
    %c0_i32 = arith.constant 0 : i32
    %c0_i32_0 = arith.constant 0 : i32
    %c0_i32_1 = arith.constant 0 : i32
    return %c0_i32, %c0_i32_0 : i32, i32
  }
  func.func @transform_2(%arg0: i32) -> (i32, i32) {
    %c0_i32 = arith.constant 0 : i32
    %c0_i32_0 = arith.constant 0 : i32
    %c0_i32_1 = arith.constant 0 : i32
    return %c0_i32, %c0_i32_0 : i32, i32
  }
  func.func @transform_3(%arg0: i32) -> (i32, i32, i32) {
    %c0_i32 = arith.constant 0 : i32
    %c0_i32_0 = arith.constant 0 : i32
    %c0_i32_1 = arith.constant 0 : i32
    return %arg0, %c0_i32, %c0_i32_0 : i32, i32, i32
  }
}

</mosaic_0001>

<llo_original>
// kernel: residual_block_forward.1
$region0: #{residual_block_forward.1}
  #allocation0 [shape = 'u32[]', space=smem, size = 0x4, offset = 0x4, fixed_abs, tag = 'smem constant byte address 0x4 - core index']
  #allocation1 [shape = 'u32[144,128]{1,0:T(1,128)}', space=vmem, size = 0x12000, scoped, tag = 'internal scratch']
  %s0 = inlined_call_operand.vmem [shape: f32[2,4,384], index: 0, kind: input, shape index: {}]
  %s1 = inlined_call_operand.vmem [shape: f32[8,37], index: 1, kind: input, shape index: {}]
  %s2 = inlined_call_operand.vmem [shape: f32[8,77], index: 2, kind: input, shape index: {}]
  %s3 = inlined_call_operand.vmem [shape: f32[2,8,384], index: 3, kind: output, shape index: {}]
  %s4 = sld [smem:[#allocation0]]
  $region45: #{residual_block_forward.1} parent=0
    _
  %s6 = ssub.s32 1, %s4
  %s7 = scalar_select 0, %s6, %s4
  loop: start=0, step=1, limit=4
  $region2: #{residual_block_forward.1} parent=0 // loop_pre_header
    _
  $region3: #{residual_block_forward.1} parent=0 // loop_header
    %s9 = sphi 0, %s13
    %p10 = scmp.ge.s32.totalorder %s9, 4
    %s19 = sphi 0, %s21
    %s22 = sphi 0, %s19
    %s23 = sphi 0, %s22
    %s39 = sphi 0, %s23
    %s43 = sphi 0, %s43
    %s45 = sphi 0, %s43
    %s46 = sphi 0, %s45
    %s60 = sphi 0, %s46
    %s64 = sphi 0, %s64
    %s66 = sphi 0, %s64
    %s67 = sphi 0, %s66
    %s81 = sphi 0, %s67
    %s87 = sphi 0, %s89
    %s90 = sphi 0, %s87
    %s91 = sphi 0, %s90
    %s107 = sphi 0, %s91
  $region4: #{residual_block_forward.1} parent=0 // loop_header_branch
    %12 = sbr.rel (%p10) target = $region8
  $region5: #{residual_block_forward.1} parent=0 // loop_body
    %s14 = ssub.s32 %s9, 1
    %s15 = ssub.s32 %s9, 2
    %s16 = sadd.s32 %s9, 1
    %s17 = ssub.s32 %s9, %s16
    %p18 = scmp.eq.s32.totalorder %s17, 0
    %s20 = sadd.s32 %s19, 1
    %s21 = scalar_select %p18, %s19, %s20
    %p24 = pneg %p18
    %p25 = scmp.eq.s32.totalorder %s9, 1
    %p26 = por %p24, %p25
    %p27 = scmp.ne.s32.totalorder %s19, %s22
    %p28 = scmp.eq.s32.totalorder %s9, 0
    %p29 = por %p27, %p28
    %p30 = scmp.ne.s32.totalorder %s19, %s22
    %p31 = scmp.eq.s32.totalorder %s14, 1
    %p32 = por %p30, %p31
    %p33 = scmp.ne.s32.totalorder %s22, %s23
    %p34 = scmp.eq.s32.totalorder %s14, 0
    %p35 = por %p33, %p34
    %p36 = scmp.ne.s32.totalorder %s22, %s23
    %p37 = scmp.eq.s32.totalorder %s15, 1
    %p38 = por %p36, %p37
    %p40 = scmp.ne.s32.totalorder %s23, %s39
    %p41 = scmp.eq.s32.totalorder %s15, 0
    %p42 = por %p40, %p41
    %s44 = sadd.s32 %s43, 1
    %p47 = scmp.eq.s32.totalorder %s9, 1
    %p48 = scmp.ne.s32.totalorder %s43, %s45
    %p49 = scmp.eq.s32.totalorder %s9, 0
    %p50 = por %p48, %p49
    %p51 = scmp.ne.s32.totalorder %s43, %s45
    %p52 = scmp.eq.s32.totalorder %s14, 1
    %p53 = por %p51, %p52
    %p54 = scmp.ne.s32.totalorder %s45, %s46
    %p55 = scmp.eq.s32.totalorder %s14, 0
    %p56 = por %p54, %p55
    %p57 = scmp.ne.s32.totalorder %s45, %s46
    %p58 = scmp.eq.s32.totalorder %s15, 1
    %p59 = por %p57, %p58
    %p61 = scmp.ne.s32.totalorder %s46, %s60
    %p62 = scmp.eq.s32.totalorder %s15, 0
    %p63 = por %p61, %p62
    %s65 = sadd.s32 %s64, 1
    %p68 = scmp.eq.s32.totalorder %s9, 1
    %p69 = scmp.ne.s32.totalorder %s64, %s66
    %p70 = scmp.eq.s32.totalorder %s9, 0
    %p71 = por %p69, %p70
    %p72 = scmp.ne.s32.totalorder %s64, %s66
    %p73 = scmp.eq.s32.totalorder %s14, 1
    %p74 = por %p72, %p73
    %p75 = scmp.ne.s32.totalorder %s66, %s67
    %p76 = scmp.eq.s32.totalorder %s14, 0
    %p77 = por %p75, %p76
    %p78 = scmp.ne.s32.totalorder %s66, %s67
    %p79 = scmp.eq.s32.totalorder %s15, 1
    %p80 = por %p78, %p79
    %p82 = scmp.ne.s32.totalorder %s67, %s81
    %p83 = scmp.eq.s32.totalorder %s15, 0
    %p84 = por %p82, %p83
    %s85 = ssub.s32 %s9, %s16
    %p86 = scmp.eq.s32.totalorder %s85, 0
    %s88 = sadd.s32 %s87, 1
    %s89 = scalar_select %p86, %s87, %s88
    %p92 = pneg %p86
    %p93 = scmp.eq.s32.totalorder %s9, 1
    %p94 = por %p92, %p93
    %p95 = scmp.ne.s32.totalorder %s87, %s90
    %p96 = scmp.eq.s32.totalorder %s9, 0
    %p97 = por %p95, %p96
    %p98 = scmp.ne.s32.totalorder %s87, %s90
    %p99 = scmp.eq.s32.totalorder %s14, 1
    %p100 = por %p98, %p99
    %p101 = scmp.ne.s32.totalorder %s90, %s91
    %p102 = scmp.eq.s32.totalorder %s14, 0
    %p103 = por %p101, %p102
    %p104 = scmp.ne.s32.totalorder %s90, %s91
    %p105 = scmp.eq.s32.totalorder %s15, 1
    %p106 = por %p104, %p105
    %p108 = scmp.ne.s32.totalorder %s91, %s107
    %p109 = scmp.eq.s32.totalorder %s15, 0
    %p110 = por %p108, %p109
    %p111 = scmp.le.s32.totalorder 1, %s9
    %p112 = scmp.lt.s32.totalorder %s9, 3
    %p113 = pnand %p111, %p112
    %p114 = pneg %p113
    // Predicated region
    $region9: #{residual_block_forward.1} parent=5 // pred_check
      _
    $region10: #{residual_block_forward.1} parent=5 // pred_check_branch
      %116 = sbr.rel (%p113) target = $region12
    $region11: #{residual_block_forward.1} parent=5 // pred_region
      %s117 = ssub.s32 %s9, 1
      // Predicated region
      $region13: #{residual_block_forward.1} parent=11 // pred_check
        %p118 = pneg %p56
      $region14: #{residual_block_forward.1} parent=11 // pred_check_branch
        %120 = sbr.rel (%p118) target = $region16
      $region15: #{residual_block_forward.1} parent=11 // pred_region
        _
      $region16: #{residual_block_forward.1} parent=11 // pred_fallthru
        _
      // Predicated region
      $region17: #{residual_block_forward.1} parent=11 // pred_check
        %p121 = pneg %p77
      $region18: #{residual_block_forward.1} parent=11 // pred_check_branch
        %123 = sbr.rel (%p121) target = $region20
      $region19: #{residual_block_forward.1} parent=11 // pred_region
        _
      $region20: #{residual_block_forward.1} parent=11 // pred_fallthru
        _
    $region12: #{residual_block_forward.1} parent=5 // pred_fallthru
      _
    %p124 = scmp.lt.s32.totalorder %s9, 2
    // Predicated region
    $region21: #{residual_block_forward.1} parent=5 // pred_check
      %p125 = pneg %p124
    $region22: #{residual_block_forward.1} parent=5 // pred_check_branch
      %127 = sbr.rel (%p125) target = $region24
    $region23: #{residual_block_forward.1} parent=5 // pred_region
      // Predicated region
      $region25: #{residual_block_forward.1} parent=23 // pred_check
        %p128 = pneg %p29
      $region26: #{residual_block_forward.1} parent=23 // pred_check_branch
        %130 = sbr.rel (%p128) target = $region28
      $region27: #{residual_block_forward.1} parent=23 // pred_region
        %p131 = scmp.lt.s32.totalorder %s9, 1
        %s132 = scalar_select %p131, %s9, 1
        %s133 = smul.addr %s132, 3
        %s134 = smul.addr %s133, 4
        %s135 = scalar_lea.vmem %s0, %s134
      $region28: #{residual_block_forward.1} parent=23 // pred_fallthru
        _
    $region24: #{residual_block_forward.1} parent=5 // pred_fallthru
      _
    %p136 = scmp.le.s32.totalorder 1, %s9
    %p137 = scmp.lt.s32.totalorder %s9, 3
    %p138 = pnand %p136, %p137
    %p139 = pneg %p138
    // Predicated region
    $region29: #{residual_block_forward.1} parent=5 // pred_check
      _
    $region30: #{residual_block_forward.1} parent=5 // pred_check_branch
      %141 = sbr.rel (%p138) target = $region32
    $region31: #{residual_block_forward.1} parent=5 // pred_region
      %s142 = ssub.s32 %s9, 1
      %p143 = scmp.lt.s32.totalorder %s14, 1
      %s144 = scalar_select %p143, %s14, 1
      %s145 = smul.addr %s144, 3
      %s146 = smul.addr %s145, 4
      %s147 = scalar_lea.vmem %s0, %s146
      %p148 = pneg %p35
      %p149 = pneg %p32
      %p150 = pneg %p56
      %p151 = pneg %p53
      %p152 = pneg %p77
      %p153 = pneg %p74
      %p154 = pneg %p103
      %p155 = pneg %p100
      %p156 = scmp.lt.s32.totalorder %s14, 1
      %s157 = scalar_select %p156, %s14, 1
      %s158 = smul.addr %s157, 3
      %s159 = smul.addr %s158, 8
      %s160 = scalar_lea.vmem %s3, %s159
      %p161 = scmp.lt.s32.totalorder %s14, 1
      %s162 = scalar_select %p161, %s14, 1
      %s163 = smul.addr %s162, 3
      %s164 = smul.addr %s163, 4
      %s165 = scalar_lea.vmem %s0, %s164
      %p166 = scmp.lt.s32.totalorder %s14, 1
      %s167 = scalar_select %p166, %s14, 1
      %s168 = smul.addr %s167, 3
      %s169 = smul.addr %s168, 8
      %s170 = scalar_lea.vmem %s3, %s169
      %v171 = vld [vmem:[%s165] sm:$0xff]
      %v172 = vld [vmem:[%s165 + $0x8] sm:$0xf]
      %vm173 = vcmp.ge.f32.partialorder %v171, 0.0
      %vm174 = vcmp.ge.f32.partialorder %v172, 0.0
      %v175 = vmul.f32 %v171, 0.2
      %v176 = vmul.f32 %v172, 0.2
      %v177 = vsel %vm173, %v171, %v175
      %v178 = vsel %vm174, %v172, %v176
      %v179 = vlaneseq
      %v180 = vand.u32 %v179, 127
      %v181 = vadd.s32 %v180, 128
      %v182 = vadd.s32 %v180, 256
      %vm183 = vcmp.lt.s32.totalorder %v180, 0
      %v184 = vsub.s32 0, %v180
      %v185 = vsel %vm183, %v184, %v180
      %v186 = vmul.u32.u64.compose %v185, 2863311531
      %v187 = vextract.low.u32 %v186
      %v188 = vextract.high.u32 %v186
      %v189 = vshrl.u32 %v188, 8
      %v190 = vmul.u32 %v189, 384
      %v191 = vsub.s32 %v185, %v190
      %v192 = vsub.s32 0, %v191
      %v193 = vsel %vm183, %v192, %v191
      %vm194 = vcmp.lt.s32.totalorder %v181, 0
      %v195 = vsub.s32 0, %v181
      %v196 = vsel %vm194, %v195, %v181
      %v197 = vmul.u32.u64.compose %v196, 2863311531
      %v198 = vextract.low.u32 %v197
      %v199 = vextract.high.u32 %v197
      %v200 = vshrl.u32 %v199, 8
      %v201 = vmul.u32 %v200, 384
      %v202 = vsub.s32 %v196, %v201
      %v203 = vsub.s32 0, %v202
      %v204 = vsel %vm194, %v203, %v202
      %vm205 = vcmp.lt.s32.totalorder %v182, 0
      %v206 = vsub.s32 0, %v182
      %v207 = vsel %vm205, %v206, %v182
      %v208 = vmul.u32.u64.compose %v207, 2863311531
      %v209 = vextract.low.u32 %v208
      %v210 = vextract.high.u32 %v208
      %v211 = vshrl.u32 %v210, 8
      %v212 = vmul.u32 %v211, 384
      %v213 = vsub.s32 %v207, %v212
      %v214 = vsub.s32 0, %v213
      %v215 = vsel %vm205, %v214, %v213
      %vm216 = vcmp.ne.s32.totalorder %v193, 0
      %vm217 = vcmp.ne.s32.totalorder %v204, 0
      %vm218 = vcmp.ne.s32.totalorder %v215, 0
      %vm219 = vcmp.lt.s32.totalorder %v193, 0
      %vm220 = vcmp.lt.s32.totalorder %v204, 0
      %vm221 = vcmp.lt.s32.totalorder %v215, 0
      %vm222 = vmand %vm219, %vm216
      %vm223 = vmand %vm220, %vm217
      %vm224 = vmand %vm221, %vm218
      %v225 = vadd.s32 %v193, 384
      %v226 = vadd.s32 %v204, 384
      %v227 = vadd.s32 %v215, 384
      %v228 = vsel %vm222, %v225, %v193
      %v229 = vsel %vm223, %v226, %v204
      %v230 = vsel %vm224, %v227, %v215
      %vm231 = vcmp.lt.s32.totalorder %v228, 0
      %v232 = vsub.s32 0, %v228
      %v233 = vsel %vm231, %v232, %v228
      %v234 = vmul.u32.u64.compose %v233, 3817748708
      %v235 = vextract.low.u32 %v234
      %v236 = vextract.high.u32 %v234
      %v237 = vshrl.u32 %v236, 4
      %v238 = vmul.u32 %v237, 18
      %v239 = vsub.s32 %v233, %v238
      %v240 = vsub.s32 0, %v239
      %v241 = vsel %vm231, %v240, %v239
      %vm242 = vcmp.lt.s32.totalorder %v229, 0
      %v243 = vsub.s32 0, %v229
      %v244 = vsel %vm242, %v243, %v229
      %v245 = vmul.u32.u64.compose %v244, 3817748708
      %v246 = vextract.low.u32 %v245
      %v247 = vextract.high.u32 %v245
      %v248 = vshrl.u32 %v247, 4
      %v249 = vmul.u32 %v248, 18
      %v250 = vsub.s32 %v244, %v249
      %v251 = vsub.s32 0, %v250
      %v252 = vsel %vm242, %v251, %v250
      %vm253 = vcmp.lt.s32.totalorder %v230, 0
      %v254 = vsub.s32 0, %v230
      %v255 = vsel %vm253, %v254, %v230
      %v256 = vmul.u32.u64.compose %v255, 3817748708
      %v257 = vextract.low.u32 %v256
      %v258 = vextract.high.u32 %v256
      %v259 = vshrl.u32 %v258, 4
      %v260 = vmul.u32 %v259, 18
      %v261 = vsub.s32 %v255, %v260
      %v262 = vsub.s32 0, %v261
      %v263 = vsel %vm253, %v262, %v261
      %vm264 = vcmp.ne.s32.totalorder %v241, 0
      %vm265 = vcmp.ne.s32.totalorder %v252, 0
      %vm266 = vcmp.ne.s32.totalorder %v263, 0
      %vm267 = vcmp.lt.s32.totalorder %v241, 0
      %vm268 = vcmp.lt.s32.totalorder %v252, 0
      %vm269 = vcmp.lt.s32.totalorder %v263, 0
      %vm270 = vmand %vm267, %vm264
      %vm271 = vmand %vm268, %vm265
      %vm272 = vmand %vm269, %vm266
      %v273 = vadd.s32 %v241, 18
      %v274 = vadd.s32 %v252, 18
      %v275 = vadd.s32 %v263, 18
      %v276 = vsel %vm270, %v273, %v241
      %v277 = vsel %vm271, %v274, %v252
      %v278 = vsel %vm272, %v275, %v263
      %v280 = vcombine.high %v177, %v177
      %282 = vrot.lane.b32.xlu0 %v177, 127
      %v283 = vpop.permute.xlu0 %282
      %284 = vrot.lane.b32.xlu0 %v280, 127
      %v285 = vpop.permute.xlu0 %284
      %286 = vrot.lane.b32.xlu0 %v178, 127
      %v287 = vpop.permute.xlu0 %286
      %vm288 = vcmp.lt.s32.totalorder %v180, 127
      %v289 = vsel %vm288, %v285, %v287
      %v290 = vsel %vm288, %v283, %v285
      %v291 = vsel %vm288, %v287, %v283
      %292 = vrot.lane.b32.xlu0 %v177, 126
      %v293 = vpop.permute.xlu0 %292
      %294 = vrot.lane.b32.xlu0 %v280, 126
      %v295 = vpop.permute.xlu0 %294
      %296 = vrot.lane.b32.xlu0 %v178, 126
      %v297 = vpop.permute.xlu0 %296
      %vm298 = vcmp.lt.s32.totalorder %v180, 126
      %v299 = vsel %vm298, %v295, %v297
      %v300 = vsel %vm298, %v293, %v295
      %v301 = vsel %vm298, %v297, %v293
      %302 = vrot.lane.b32.xlu0 %v177, 110
      %v303 = vpop.permute.xlu0 %302
      %304 = vrot.lane.b32.xlu0 %v280, 110
      %v305 = vpop.permute.xlu0 %304
      %306 = vrot.lane.b32.xlu0 %v178, 110
      %v307 = vpop.permute.xlu0 %306
      %vm308 = vcmp.lt.s32.totalorder %v180, 110
      %v309 = vsel %vm308, %v305, %v307
      %v310 = vsel %vm308, %v303, %v305
      %v311 = vsel %vm308, %v307, %v303
      %312 = vrot.lane.b32.xlu0 %v177, 109
      %v313 = vpop.permute.xlu0 %312
      %314 = vrot.lane.b32.xlu0 %v280, 109
      %v315 = vpop.permute.xlu0 %314
      %316 = vrot.lane.b32.xlu0 %v178, 109
      %v317 = vpop.permute.xlu0 %316
      %vm318 = vcmp.lt.s32.totalorder %v180, 109
      %v319 = vsel %vm318, %v315, %v317
      %v320 = vsel %vm318, %v313, %v315
      %v321 = vsel %vm318, %v317, %v313
      %322 = vrot.lane.b32.xlu0 %v177, 108
      %v323 = vpop.permute.xlu0 %322
      %324 = vrot.lane.b32.xlu0 %v280, 108
      %v325 = vpop.permute.xlu0 %324
      %326 = vrot.lane.b32.xlu0 %v178, 108
      %v327 = vpop.permute.xlu0 %326
      %vm328 = vcmp.lt.s32.totalorder %v180, 108
      %v329 = vsel %vm328, %v325, %v327
      %v330 = vsel %vm328, %v323, %v325
      %v331 = vsel %vm328, %v327, %v323
      %332 = vrot.lane.b32.xlu0 %v177, 92
      %v333 = vpop.permute.xlu0 %332
      %334 = vrot.lane.b32.xlu0 %v280, 92
      %v335 = vpop.permute.xlu0 %334
      %336 = vrot.lane.b32.xlu0 %v178, 92
      %v337 = vpop.permute.xlu0 %336
      %vm338 = vcmp.lt.s32.totalorder %v180, 92
      %v339 = vsel %vm338, %v335, %v337
      %v340 = vsel %vm338, %v333, %v335
      %v341 = vsel %vm338, %v337, %v333
      %342 = vrot.lane.b32.xlu0 %v177, 91
      %v343 = vpop.permute.xlu0 %342
      %344 = vrot.lane.b32.xlu0 %v280, 91
      %v345 = vpop.permute.xlu0 %344
      %346 = vrot.lane.b32.xlu0 %v178, 91
      %v347 = vpop.permute.xlu0 %346
      %vm348 = vcmp.lt.s32.totalorder %v180, 91
      %v349 = vsel %vm348, %v345, %v347
      %v350 = vsel %vm348, %v343, %v345
      %v351 = vsel %vm348, %v347, %v343
      %352 = vrot.lane.b32.xlu0 %v177, 90
      %v353 = vpop.permute.xlu0 %352
      %354 = vrot.lane.b32.xlu0 %v280, 90
      %v355 = vpop.permute.xlu0 %354
      %356 = vrot.lane.b32.xlu0 %v178, 90
      %v357 = vpop.permute.xlu0 %356
      %vm358 = vcmp.lt.s32.totalorder %v180, 90
      %v359 = vsel %vm358, %v355, %v357
      %v360 = vsel %vm358, %v353, %v355
      %v361 = vsel %vm358, %v357, %v353
      %v365 = vrot.slane %v290, 4
      %v366 = vrot.slane %v289, 4
      %v367 = vrot.slane %v291, 4
      %v374 = vrot.slane %v310, 4
      %v375 = vrot.slane %v309, 4
      %v376 = vrot.slane %v311, 4
      %v383 = vrot.slane %v330, 4
      %v384 = vrot.slane %v329, 4
      %v385 = vrot.slane %v331, 4
      %v392 = vrot.slane %v350, 4
      %v393 = vrot.slane %v349, 4
      %v394 = vrot.slane %v351, 4
      %vm398 = vcmask 1043456
      %v399 = vsel %vm398, %v177, %v365
      %v400 = vsel %vm398, %v280, %v366
      %v401 = vsel %vm398, %v178, %v367
      %v402 = vsel %vm398, %v300, %v374
      %v403 = vsel %vm398, %v299, %v375
      %v404 = vsel %vm398, %v301, %v376
      %v405 = vsel %vm398, %v320, %v383
      %v406 = vsel %vm398, %v319, %v384
      %v407 = vsel %vm398, %v321, %v385
      %v408 = vsel %vm398, %v340, %v392
      %v409 = vsel %vm398, %v339, %v393
      %v410 = vsel %vm398, %v341, %v394
      %v411 = vsel %vm398, %v360, 1.0
      %v412 = vsel %vm398, %v359, 1.0
      %v413 = vsel %vm398, %v361, 1.0
      %v414 = vld [vmem:[%s1] sm:$0xff]
      %vm415 = vcmask 302080
      %v417 = vsel %vm415, %v414, 0
      %vm419 = vcmask 1044480
      %v421 = vsel %vm419, %v411, 0
      %v424 = vsel %vm419, %v412, 0
      %v427 = vsel %vm419, %v413, 0
      %429 = vmatprep.subr.mxu0 0.0
      %430 = vmatpush1.msra.mxu0 0.0
      %431 = vmatprep.subr.mxu0 0.0
      %432 = vmatpush1.msra.mxu0 0.0
      %433 = vmatprep.subr.mxu0 0.0
      %434 = vmatpush1.msra.mxu0 0.0
      %435 = vmatprep.subr.mxu0 0.0
      %436 = vmatpush1.msra.mxu0 0.0
      %437 = vmatprep.subr.mxu0 0.0
      %438 = vmatpush1.msra.mxu0 0.0
      %439 = vmatprep.subr.mxu0 0.0
      %440 = vmatpush1.msra.mxu0 0.0
      %441 = vmatprep.subr.mxu0 0.0
      %442 = vmatpush1.msra.mxu0 0.0
      %443 = vmatprep.subr.mxu0 0.0
      %444 = vmatpush1.msra.mxu0 0.0
      %445 = vmatprep.subr.mxu0 0.0
      %446 = vmatpush1.msra.mxu0 0.0
      %447 = vmatprep.subr.mxu0 0.0
      %448 = vmatpush1.msra.mxu0 0.0
      %449 = vmatprep.subr.mxu0 0.0
      %450 = vmatpush1.msra.mxu0 0.0
      %451 = vmatprep.subr.mxu0 %v424
      %452 = vmatpush1.msra.mxu0 %v421
      %453 = vmatprep.subr.mxu0 %v409
      %454 = vmatpush1.msra.mxu0 %v408
      %455 = vmatprep.subr.mxu0 %v406
      %456 = vmatpush1.msra.mxu0 %v405
      %457 = vmatprep.subr.mxu0 %v403
      %458 = vmatpush1.msra.mxu0 %v402
      %459 = vmatprep.subr.mxu0 %v400
      %460 = vmatpush1.msra.mxu0 %v399
      %461 = vmatprep.subr.mxu0 0.0
      %462 = vmatpush2.msra.mxu0 0.0
      %463 = vmatprep.subr.mxu0 0.0
      %464 = vmatpush2.msra.mxu0 0.0
      %465 = vmatprep.subr.mxu0 0.0
      %466 = vmatpush2.msra.mxu0 0.0
      %467 = vmatprep.subr.mxu0 0.0
      %468 = vmatpush2.msra.mxu0 0.0
      %469 = vmatprep.subr.mxu0 0.0
      %470 = vmatpush2.msra.mxu0 0.0
      %471 = vmatprep.subr.mxu0 0.0
      %472 = vmatpush2.msra.mxu0 0.0
      %473 = vmatprep.subr.mxu0 0.0
      %474 = vmatpush2.msra.mxu0 0.0
      %475 = vmatprep.subr.mxu0 0.0
      %476 = vmatpush2.msra.mxu0 0.0
      %477 = vmatprep.subr.mxu0 0.0
      %478 = vmatpush2.msra.mxu0 0.0
      %479 = vmatprep.subr.mxu0 0.0
      %480 = vmatpush2.msra.mxu0 0.0
      %481 = vmatprep.subr.mxu0 0.0
      %482 = vmatpush2.msra.mxu0 0.0
      %483 = vmatprep.subr.mxu0 0.0
      %484 = vmatpush2.msra.mxu0 0.0
      %485 = vmatprep.subr.mxu0 0.0
      %486 = vmatpush2.msra.mxu0 0.0
      %487 = vmatprep.subr.mxu0 0.0
      %488 = vmatpush2.msra.mxu0 0.0
      %489 = vmatprep.subr.mxu0 0.0
      %490 = vmatpush2.msra.mxu0 0.0
      %491 = vmatprep.subr.mxu0 0.0
      %492 = vmatpush2.msra.mxu0 0.0
      %493 = vmatprep.mubr.f32.mxu0 0.0
      %494 = vmatmul.mubr.f32.gmra.mxu0 %v417
      %v495 = vpop.f32.mrf.mxu0
      %v496 = vadd.f32 0.0, %v495
      %v497 = vpop.f32.mrf.mxu0
      %v498 = vadd.f32 0.0, %v497
      %499 = vdwg.mxu0
      %500 = vmatprep.subr.mxu0 0.0
      %501 = vmatpush1.msra.mxu0 0.0
      %502 = vmatprep.subr.mxu0 0.0
      %503 = vmatpush1.msra.mxu0 0.0
      %504 = vmatprep.subr.mxu0 0.0
      %505 = vmatpush1.msra.mxu0 0.0
      %506 = vmatprep.subr.mxu0 0.0
      %507 = vmatpush1.msra.mxu0 0.0
      %508 = vmatprep.subr.mxu0 0.0
      %509 = vmatpush1.msra.mxu0 0.0
      %510 = vmatprep.subr.mxu0 0.0
      %511 = vmatpush1.msra.mxu0 0.0
      %512 = vmatprep.subr.mxu0 0.0
      %513 = vmatpush1.msra.mxu0 0.0
      %514 = vmatprep.subr.mxu0 0.0
      %515 = vmatpush1.msra.mxu0 0.0
      %516 = vmatprep.subr.mxu0 0.0
      %517 = vmatpush1.msra.mxu0 0.0
      %518 = vmatprep.subr.mxu0 0.0
      %519 = vmatpush1.msra.mxu0 0.0
      %520 = vmatprep.subr.mxu0 0.0
      %521 = vmatpush1.msra.mxu0 0.0
      %522 = vmatprep.subr.mxu0 0.0
      %523 = vmatpush1.msra.mxu0 %v427
      %524 = vmatprep.subr.mxu0 0.0
      %525 = vmatpush1.msra.mxu0 %v410
      %526 = vmatprep.subr.mxu0 0.0
      %527 = vmatpush1.msra.mxu0 %v407
      %528 = vmatprep.subr.mxu0 0.0
      %529 = vmatpush1.msra.mxu0 %v404
      %530 = vmatprep.subr.mxu0 0.0
      %531 = vmatpush1.msra.mxu0 %v401
      %532 = vmatprep.subr.mxu0 0.0
      %533 = vmatpush2.msra.mxu0 0.0
      %534 = vmatprep.subr.mxu0 0.0
      %535 = vmatpush2.msra.mxu0 0.0
      %536 = vmatprep.subr.mxu0 0.0
      %537 = vmatpush2.msra.mxu0 0.0
      %538 = vmatprep.subr.mxu0 0.0
      %539 = vmatpush2.msra.mxu0 0.0
      %540 = vmatprep.subr.mxu0 0.0
      %541 = vmatpush2.msra.mxu0 0.0
      %542 = vmatprep.subr.mxu0 0.0
      %543 = vmatpush2.msra.mxu0 0.0
      %544 = vmatprep.subr.mxu0 0.0
      %545 = vmatpush2.msra.mxu0 0.0
      %546 = vmatprep.subr.mxu0 0.0
      %547 = vmatpush2.msra.mxu0 0.0
      %548 = vmatprep.subr.mxu0 0.0
      %549 = vmatpush2.msra.mxu0 0.0
      %550 = vmatprep.subr.mxu0 0.0
      %551 = vmatpush2.msra.mxu0 0.0
      %552 = vmatprep.subr.mxu0 0.0
      %553 = vmatpush2.msra.mxu0 0.0
      %554 = vmatprep.subr.mxu0 0.0
      %555 = vmatpush2.msra.mxu0 0.0
      %556 = vmatprep.subr.mxu0 0.0
      %557 = vmatpush2.msra.mxu0 0.0
      %558 = vmatprep.subr.mxu0 0.0
      %559 = vmatpush2.msra.mxu0 0.0
      %560 = vmatprep.subr.mxu0 0.0
      %561 = vmatpush2.msra.mxu0 0.0
      %562 = vmatprep.subr.mxu0 0.0
      %563 = vmatpush2.msra.mxu0 0.0
      %564 = vmatprep.mubr.f32.mxu0 0.0
      %565 = vmatmul.mubr.f32.gmra.mxu0 %v417
      %v566 = vpop.f32.mrf.mxu0
      %v567 = vadd.f32 0.0, %v566
      %v568 = vpop.f32.mrf.mxu0
      %569 = vdwg.mxu0
      %vm570 = vcmp.ge.f32.partialorder %v496, 0.0
      %vm571 = vcmp.ge.f32.partialorder %v498, 0.0
      %vm572 = vcmp.ge.f32.partialorder %v567, 0.0
      %v573 = vmul.f32 %v496, 0.2
      %v574 = vmul.f32 %v498, 0.2
      %v575 = vmul.f32 %v567, 0.2
      %v576 = vsel %vm570, %v496, %v573
      %v577 = vsel %vm571, %v498, %v574
      %v578 = vsel %vm572, %v567, %v575
      %579 = vrot.lane.b32.xlu0 %v576, 1
      %v580 = vpop.permute.xlu0 %579
      %581 = vrot.lane.b32.xlu0 %v577, 1
      %v582 = vpop.permute.xlu0 %581
      %583 = vrot.lane.b32.xlu0 %v578, 1
      %v584 = vpop.permute.xlu0 %583
      %vm585 = vcmp.lt.s32.totalorder %v180, 1
      %v586 = vsel %vm585, %v582, %v584
      %v587 = vsel %vm585, %v580, %v582
      %v588 = vsel %vm585, %v584, %v580
      %589 = vrot.lane.b32.xlu0 %v576, 3
      %v590 = vpop.permute.xlu0 %589
      %591 = vrot.lane.b32.xlu0 %v577, 3
      %v592 = vpop.permute.xlu0 %591
      %593 = vrot.lane.b32.xlu0 %v578, 3
      %v594 = vpop.permute.xlu0 %593
      %vm595 = vcmp.lt.s32.totalorder %v180, 3
      %v596 = vsel %vm595, %v592, %v594
      %v597 = vsel %vm595, %v590, %v592
      %v598 = vsel %vm595, %v594, %v590
      %599 = vrot.lane.b32.xlu0 %v576, 127
      %v600 = vpop.permute.xlu0 %599
      %601 = vrot.lane.b32.xlu0 %v577, 127
      %v602 = vpop.permute.xlu0 %601
      %603 = vrot.lane.b32.xlu0 %v578, 127
      %v604 = vpop.permute.xlu0 %603
      %v605 = vsel %vm288, %v602, %v604
      %v606 = vsel %vm288, %v600, %v602
      %v607 = vsel %vm288, %v604, %v600
      %vm608 = vcmp.eq.s32.totalorder %v276, 0
      %vm609 = vcmp.eq.s32.totalorder %v277, 0
      %vm610 = vcmp.eq.s32.totalorder %v278, 0
      %vm611 = vcmp.eq.s32.totalorder %v276, 17
      %vm612 = vcmp.eq.s32.totalorder %v277, 17
      %vm613 = vcmp.eq.s32.totalorder %v278, 17
      %v614 = vsel %vm611, 1, 0
      %v615 = vsel %vm612, 1, 0
      %v616 = vsel %vm613, 1, 0
      %vm617 = vcmp.eq.s32.totalorder %v614, 1
      %vm618 = vcmp.eq.s32.totalorder %v615, 1
      %vm619 = vcmp.eq.s32.totalorder %v616, 1
      %v620 = vsel %vm617, %v598, %v588
      %v621 = vsel %vm618, %v597, %v587
      %v622 = vsel %vm619, %v596, %v586
      %v623 = vsel %vm608, 1, 0
      %v624 = vsel %vm609, 1, 0
      %v625 = vsel %vm610, 1, 0
      %vm626 = vcmp.eq.s32.totalorder %v623, 1
      %vm627 = vcmp.eq.s32.totalorder %v624, 1
      %vm628 = vcmp.eq.s32.totalorder %v625, 1
      %v629 = vsel %vm626, %v606, %v620
      %v630 = vsel %vm627, %v605, %v621
      %v631 = vsel %vm628, %v607, %v622
      %632 = vrot.lane.b32.xlu0 %v629, 110
      %v633 = vpop.permute.xlu0 %632
      %634 = vrot.lane.b32.xlu0 %v630, 110
      %v635 = vpop.permute.xlu0 %634
      %636 = vrot.lane.b32.xlu0 %v631, 110
      %v637 = vpop.permute.xlu0 %636
      %v638 = vsel %vm308, %v635, %v637
      %v639 = vsel %vm308, %v633, %v635
      %v640 = vsel %vm308, %v637, %v633
      %641 = vrot.lane.b32.xlu0 %v629, 18
      %v642 = vpop.permute.xlu0 %641
      %643 = vrot.lane.b32.xlu0 %v630, 18
      %v644 = vpop.permute.xlu0 %643
      %645 = vrot.lane.b32.xlu0 %v631, 18
      %v646 = vpop.permute.xlu0 %645
      %vm647 = vcmp.lt.s32.totalorder %v180, 18
      %v648 = vsel %vm647, %v644, %v646
      %v649 = vsel %vm647, %v642, %v644
      %v650 = vsel %vm647, %v646, %v642
      %651 = vrot.lane.b32.xlu0 %v629, 54
      %v652 = vpop.permute.xlu0 %651
      %653 = vrot.lane.b32.xlu0 %v630, 54
      %v654 = vpop.permute.xlu0 %653
      %655 = vrot.lane.b32.xlu0 %v631, 54
      %v656 = vpop.permute.xlu0 %655
      %vm657 = vcmp.lt.s32.totalorder %v180, 54
      %v658 = vsel %vm657, %v654, %v656
      %v659 = vsel %vm657, %v652, %v654
      %v660 = vsel %vm657, %v656, %v652
      %vm661 = vcmp.lt.s32.totalorder %v228, 18
      %vm662 = vcmp.lt.s32.totalorder %v229, 18
      %vm663 = vcmp.lt.s32.totalorder %v230, 18
      %vm664 = vcmp.lt.s32.totalorder %v228, 306
      %vm665 = vcmp.lt.s32.totalorder %v229, 306
      %vm666 = vcmp.lt.s32.totalorder %v230, 306
      %v667 = vsel %vm664, 1, 0
      %v668 = vsel %vm665, 1, 0
      %v669 = vsel %vm666, 1, 0
      %vm670 = vcmp.eq.s32.totalorder %v667, 1
      %vm671 = vcmp.eq.s32.totalorder %v668, 1
      %vm672 = vcmp.eq.s32.totalorder %v669, 1
      %v673 = vsel %vm670, %v650, %v660
      %v674 = vsel %vm671, %v649, %v659
      %v675 = vsel %vm672, %v648, %v658
      %v676 = vsel %vm661, 1, 0
      %v677 = vsel %vm662, 1, 0
      %v678 = vsel %vm663, 1, 0
      %vm679 = vcmp.eq.s32.totalorder %v676, 1
      %vm680 = vcmp.eq.s32.totalorder %v677, 1
      %vm681 = vcmp.eq.s32.totalorder %v678, 1
      %v682 = vsel %vm679, %v639, %v673
      %v683 = vsel %vm680, %v638, %v674
      %v684 = vsel %vm681, %v640, %v675
      %v686 = vcombine.high %v171, %v171
      %688 = vrot.lane.b32.xlu0 %v171, 109
      %v689 = vpop.permute.xlu0 %688
      %690 = vrot.lane.b32.xlu0 %v686, 109
      %v691 = vpop.permute.xlu0 %690
      %692 = vrot.lane.b32.xlu0 %v172, 109
      %v693 = vpop.permute.xlu0 %692
      %v694 = vsel %vm318, %v691, %v693
      %v695 = vsel %vm318, %v689, %v691
      %v696 = vsel %vm318, %v693, %v689
      %697 = vrot.lane.b32.xlu0 %v682, 127
      %v698 = vpop.permute.xlu0 %697
      %699 = vrot.lane.b32.xlu0 %v683, 127
      %v700 = vpop.permute.xlu0 %699
      %701 = vrot.lane.b32.xlu0 %v684, 127
      %v702 = vpop.permute.xlu0 %701
      %v703 = vsel %vm288, %v700, %v702
      %v704 = vsel %vm288, %v698, %v700
      %v705 = vsel %vm288, %v702, %v698
      %706 = vrot.lane.b32.xlu0 %v682, 126
      %v707 = vpop.permute.xlu0 %706
      %708 = vrot.lane.b32.xlu0 %v683, 126
      %v709 = vpop.permute.xlu0 %708
      %710 = vrot.lane.b32.xlu0 %v684, 126
      %v711 = vpop.permute.xlu0 %710
      %v712 = vsel %vm298, %v709, %v711
      %v713 = vsel %vm298, %v707, %v709
      %v714 = vsel %vm298, %v711, %v707
      %715 = vrot.lane.b32.xlu0 %v682, 110
      %v716 = vpop.permute.xlu0 %715
      %717 = vrot.lane.b32.xlu0 %v683, 110
      %v718 = vpop.permute.xlu0 %717
      %719 = vrot.lane.b32.xlu0 %v684, 110
      %v720 = vpop.permute.xlu0 %719
      %v721 = vsel %vm308, %v718, %v720
      %v722 = vsel %vm308, %v716, %v718
      %v723 = vsel %vm308, %v720, %v716
      %724 = vrot.lane.b32.xlu0 %v682, 109
      %v725 = vpop.permute.xlu0 %724
      %726 = vrot.lane.b32.xlu0 %v683, 109
      %v727 = vpop.permute.xlu0 %726
      %728 = vrot.lane.b32.xlu0 %v684, 109
      %v729 = vpop.permute.xlu0 %728
      %v730 = vsel %vm318, %v727, %v729
      %v731 = vsel %vm318, %v725, %v727
      %v732 = vsel %vm318, %v729, %v725
      %733 = vrot.lane.b32.xlu0 %v682, 108
      %v734 = vpop.permute.xlu0 %733
      %735 = vrot.lane.b32.xlu0 %v683, 108
      %v736 = vpop.permute.xlu0 %735
      %737 = vrot.lane.b32.xlu0 %v684, 108
      %v738 = vpop.permute.xlu0 %737
      %v739 = vsel %vm328, %v736, %v738
      %v740 = vsel %vm328, %v734, %v736
      %v741 = vsel %vm328, %v738, %v734
      %742 = vrot.lane.b32.xlu0 %v682, 92
      %v743 = vpop.permute.xlu0 %742
      %744 = vrot.lane.b32.xlu0 %v683, 92
      %v745 = vpop.permute.xlu0 %744
      %746 = vrot.lane.b32.xlu0 %v684, 92
      %v747 = vpop.permute.xlu0 %746
      %v748 = vsel %vm338, %v745, %v747
      %v749 = vsel %vm338, %v743, %v745
      %v750 = vsel %vm338, %v747, %v743
      %751 = vrot.lane.b32.xlu0 %v682, 91
      %v752 = vpop.permute.xlu0 %751
      %753 = vrot.lane.b32.xlu0 %v683, 91
      %v754 = vpop.permute.xlu0 %753
      %755 = vrot.lane.b32.xlu0 %v684, 91
      %v756 = vpop.permute.xlu0 %755
      %v757 = vsel %vm348, %v754, %v756
      %v758 = vsel %vm348, %v752, %v754
      %v759 = vsel %vm348, %v756, %v752
      %760 = vrot.lane.b32.xlu0 %v682, 90
      %v761 = vpop.permute.xlu0 %760
      %762 = vrot.lane.b32.xlu0 %v683, 90
      %v763 = vpop.permute.xlu0 %762
      %764 = vrot.lane.b32.xlu0 %v684, 90
      %v765 = vpop.permute.xlu0 %764
      %v766 = vsel %vm358, %v763, %v765
      %v767 = vsel %vm358, %v761, %v763
      %v768 = vsel %vm358, %v765, %v761
      %v769 = vsel %vm398, %v695, 1.0
      %v770 = vsel %vm398, %v694, 1.0
      %v771 = vsel %vm398, %v696, 1.0
      %v772 = vld [vmem:[%s2] sm:$0xff]
      %vm773 = vcmask 629760
      %v775 = vsel %vm773, %v772, 0
      %v778 = vsel %vm419, %v769, 0
      %v781 = vsel %vm419, %v770, 0
      %v784 = vsel %vm419, %v771, 0
      %786 = vmatprep.subr.mxu0 0.0
      %787 = vmatpush1.msra.mxu0 0.0
      %788 = vmatprep.subr.mxu0 0.0
      %789 = vmatpush1.msra.mxu0 0.0
      %790 = vmatprep.subr.mxu0 0.0
      %791 = vmatpush1.msra.mxu0 0.0
      %792 = vmatprep.subr.mxu0 0.0
      %793 = vmatpush1.msra.mxu0 0.0
      %794 = vmatprep.subr.mxu0 0.0
      %795 = vmatpush1.msra.mxu0 0.0
      %796 = vmatprep.subr.mxu0 0.0
      %797 = vmatpush1.msra.mxu0 0.0
      %798 = vmatprep.subr.mxu0 %v781
      %799 = vmatpush1.msra.mxu0 %v778
      %800 = vmatprep.subr.mxu0 %v766
      %801 = vmatpush1.msra.mxu0 %v767
      %802 = vmatprep.subr.mxu0 %v757
      %803 = vmatpush1.msra.mxu0 %v758
      %804 = vmatprep.subr.mxu0 %v748
      %805 = vmatpush1.msra.mxu0 %v749
      %806 = vmatprep.subr.mxu0 %v739
      %807 = vmatpush1.msra.mxu0 %v740
      %808 = vmatprep.subr.mxu0 %v730
      %809 = vmatpush1.msra.mxu0 %v731
      %810 = vmatprep.subr.mxu0 %v721
      %811 = vmatpush1.msra.mxu0 %v722
      %812 = vmatprep.subr.mxu0 %v712
      %813 = vmatpush1.msra.mxu0 %v713
      %814 = vmatprep.subr.mxu0 %v703
      %815 = vmatpush1.msra.mxu0 %v704
      %816 = vmatprep.subr.mxu0 %v683
      %817 = vmatpush1.msra.mxu0 %v682
      %818 = vmatprep.subr.mxu0 0.0
      %819 = vmatpush2.msra.mxu0 0.0
      %820 = vmatprep.subr.mxu0 0.0
      %821 = vmatpush2.msra.mxu0 0.0
      %822 = vmatprep.subr.mxu0 0.0
      %823 = vmatpush2.msra.mxu0 0.0
      %824 = vmatprep.subr.mxu0 0.0
      %825 = vmatpush2.msra.mxu0 0.0
      %826 = vmatprep.subr.mxu0 0.0
      %827 = vmatpush2.msra.mxu0 0.0
      %828 = vmatprep.subr.mxu0 0.0
      %829 = vmatpush2.msra.mxu0 0.0
      %830 = vmatprep.subr.mxu0 0.0
      %831 = vmatpush2.msra.mxu0 0.0
      %832 = vmatprep.subr.mxu0 0.0
      %833 = vmatpush2.msra.mxu0 0.0
      %834 = vmatprep.subr.mxu0 0.0
      %835 = vmatpush2.msra.mxu0 0.0
      %836 = vmatprep.subr.mxu0 0.0
      %837 = vmatpush2.msra.mxu0 0.0
      %838 = vmatprep.subr.mxu0 0.0
      %839 = vmatpush2.msra.mxu0 0.0
      %840 = vmatprep.subr.mxu0 0.0
      %841 = vmatpush2.msra.mxu0 0.0
      %842 = vmatprep.subr.mxu0 0.0
      %843 = vmatpush2.msra.mxu0 0.0
      %844 = vmatprep.subr.mxu0 0.0
      %845 = vmatpush2.msra.mxu0 0.0
      %846 = vmatprep.subr.mxu0 0.0
      %847 = vmatpush2.msra.mxu0 0.0
      %848 = vmatprep.subr.mxu0 0.0
      %849 = vmatpush2.msra.mxu0 0.0
      %850 = vmatprep.mubr.f32.mxu0 0.0
      %851 = vmatmul.mubr.f32.gmra.mxu0 %v775
      %v852 = vpop.f32.mrf.mxu0
      %v853 = vadd.f32 0.0, %v852
      %v854 = vpop.f32.mrf.mxu0
      %v855 = vadd.f32 0.0, %v854
      %856 = vdwg.mxu0
      %857 = vmatprep.subr.mxu0 0.0
      %858 = vmatpush1.msra.mxu0 0.0
      %859 = vmatprep.subr.mxu0 0.0
      %860 = vmatpush1.msra.mxu0 0.0
      %861 = vmatprep.subr.mxu0 0.0
      %862 = vmatpush1.msra.mxu0 0.0
      %863 = vmatprep.subr.mxu0 0.0
      %864 = vmatpush1.msra.mxu0 0.0
      %865 = vmatprep.subr.mxu0 0.0
      %866 = vmatpush1.msra.mxu0 0.0
      %867 = vmatprep.subr.mxu0 0.0
      %868 = vmatpush1.msra.mxu0 0.0
      %869 = vmatprep.subr.mxu0 0.0
      %870 = vmatpush1.msra.mxu0 %v784
      %871 = vmatprep.subr.mxu0 0.0
      %872 = vmatpush1.msra.mxu0 %v768
      %873 = vmatprep.subr.mxu0 0.0
      %874 = vmatpush1.msra.mxu0 %v759
      %875 = vmatprep.subr.mxu0 0.0
      %876 = vmatpush1.msra.mxu0 %v750
      %877 = vmatprep.subr.mxu0 0.0
      %878 = vmatpush1.msra.mxu0 %v741
      %879 = vmatprep.subr.mxu0 0.0
      %880 = vmatpush1.msra.mxu0 %v732
      %881 = vmatprep.subr.mxu0 0.0
      %882 = vmatpush1.msra.mxu0 %v723
      %883 = vmatprep.subr.mxu0 0.0
      %884 = vmatpush1.msra.mxu0 %v714
      %885 = vmatprep.subr.mxu0 0.0
      %886 = vmatpush1.msra.mxu0 %v705
      %887 = vmatprep.subr.mxu0 0.0
      %888 = vmatpush1.msra.mxu0 %v684
      %889 = vmatprep.subr.mxu0 0.0
      %890 = vmatpush2.msra.mxu0 0.0
      %891 = vmatprep.subr.mxu0 0.0
      %892 = vmatpush2.msra.mxu0 0.0
      %893 = vmatprep.subr.mxu0 0.0
      %894 = vmatpush2.msra.mxu0 0.0
      %895 = vmatprep.subr.mxu0 0.0
      %896 = vmatpush2.msra.mxu0 0.0
      %897 = vmatprep.subr.mxu0 0.0
      %898 = vmatpush2.msra.mxu0 0.0
      %899 = vmatprep.subr.mxu0 0.0
      %900 = vmatpush2.msra.mxu0 0.0
      %901 = vmatprep.subr.mxu0 0.0
      %902 = vmatpush2.msra.mxu0 0.0
      %903 = vmatprep.subr.mxu0 0.0
      %904 = vmatpush2.msra.mxu0 0.0
      %905 = vmatprep.subr.mxu0 0.0
      %906 = vmatpush2.msra.mxu0 0.0
      %907 = vmatprep.subr.mxu0 0.0
      %908 = vmatpush2.msra.mxu0 0.0
      %909 = vmatprep.subr.mxu0 0.0
      %910 = vmatpush2.msra.mxu0 0.0
      %911 = vmatprep.subr.mxu0 0.0
      %912 = vmatpush2.msra.mxu0 0.0
      %913 = vmatprep.subr.mxu0 0.0
      %914 = vmatpush2.msra.mxu0 0.0
      %915 = vmatprep.subr.mxu0 0.0
      %916 = vmatpush2.msra.mxu0 0.0
      %917 = vmatprep.subr.mxu0 0.0
      %918 = vmatpush2.msra.mxu0 0.0
      %919 = vmatprep.subr.mxu0 0.0
      %920 = vmatpush2.msra.mxu0 0.0
      %921 = vmatprep.mubr.f32.mxu0 0.0
      %922 = vmatmul.mubr.f32.gmra.mxu0 %v775
      %v923 = vpop.f32.mrf.mxu0
      %v924 = vadd.f32 0.0, %v923
      %v925 = vpop.f32.mrf.mxu0
      %926 = vdwg.mxu0
      %927 = vst [vmem:[%s170] sm:$0xff] %v853
      %928 = vst [vmem:[%s170 + $0x8] sm:$0xff] %v855
      %929 = vst [vmem:[%s170 + $0x10] sm:$0xff] %v924
      %p930 = scmp.lt.s32.totalorder %s14, 1
      %s931 = scalar_select %p930, %s14, 1
      %s932 = smul.addr %s931, 3
      %s933 = smul.addr %s932, 8
      %s934 = scalar_lea.vmem %s3, %s933
      // Predicated region
      $region33: #{residual_block_forward.1} parent=31 // pred_check
        %p935 = pneg %p100
      $region34: #{residual_block_forward.1} parent=31 // pred_check_branch
        %937 = sbr.rel (%p935) target = $region36
      $region35: #{residual_block_forward.1} parent=31 // pred_region
        _
      $region36: #{residual_block_forward.1} parent=31 // pred_fallthru
        _
    $region32: #{residual_block_forward.1} parent=5 // pred_fallthru
      _
    %p938 = scmp.le.s32.totalorder 2, %s9
    // Predicated region
    $region37: #{residual_block_forward.1} parent=5 // pred_check
      %p939 = pneg %p938
    $region38: #{residual_block_forward.1} parent=5 // pred_check_branch
      %941 = sbr.rel (%p939) target = $region40
    $region39: #{residual_block_forward.1} parent=5 // pred_region
      %s942 = ssub.s32 %s9, 2
      // Predicated region
      $region41: #{residual_block_forward.1} parent=39 // pred_check
        %p943 = pneg %p106
      $region42: #{residual_block_forward.1} parent=39 // pred_check_branch
        %945 = sbr.rel (%p943) target = $region44
      $region43: #{residual_block_forward.1} parent=39 // pred_region
        %p946 = scmp.lt.s32.totalorder %s15, 1
        %s947 = scalar_select %p946, %s15, 1
        %s948 = smul.addr %s947, 3
        %s949 = smul.addr %s948, 8
        %s950 = scalar_lea.vmem %s3, %s949
      $region44: #{residual_block_forward.1} parent=39 // pred_fallthru
        _
    $region40: #{residual_block_forward.1} parent=5 // pred_fallthru
      _
  $region6: #{residual_block_forward.1} parent=0 // loop_footer
    %s13 = sadd.s32 1, %s9
  $region7: #{residual_block_forward.1} parent=0 // loop_footer_branch
    %8 = sbr.rel target = $region3
  $region8: #{residual_block_forward.1} parent=0 // loop_exit
    _

</llo_original>
